<compile_context>
chip_gen: v7x
topology: tpu7x:2x2x1
jax: 0.10.0
libtpu: 0.0.40
codegen_flags: <defaults>
</compile_context>

<pallas_src>
import functools

import jax
import jax.numpy as jnp
from jax.experimental import pallas as pl
from jax.experimental.pallas import tpu as pltpu

LOG_SIG_MAX = 2.0
LOG_SIG_MIN = -20.0


def _round_up(n, m):
    return ((n + m - 1) // m) * m


def _make_kernel(num_actions):
    A = num_actions

    def kernel(
        state_ref,          # (TILE_B, S)        compute dtype (bf16 or f32)
        w1_ref, b1_ref,     # (S, H_pad) cdt,    (1, H_pad) f32
        w2_ref, b2_ref,     # (H_pad, H_pad) cdt,(1, H_pad) f32
        wh_ref, bh_ref,     # (H_pad, O_pad) cdt,(1, O_pad) f32   fused mean|log_std
        out_ref,            # (TILE_B, O_pad)    f32               fused mean|log_std
    ):
        x = state_ref[...]

        # linear1 + relu  (MXU with f32 accumulation; bias/relu on f32 -> VPU-safe on v5e)
        h1 = jnp.dot(x, w1_ref[...], preferred_element_type=jnp.float32)
        h1 = jnp.maximum(h1 + b1_ref[...], 0.0).astype(w2_ref.dtype)

        # linear2 + relu
        h2 = jnp.dot(h1, w2_ref[...], preferred_element_type=jnp.float32)
        h2 = jnp.maximum(h2 + b2_ref[...], 0.0).astype(wh_ref.dtype)

        # fused heads: columns [0, A) = mean, [A, 2A) = log_std, rest = padding
        heads = jnp.dot(h2, wh_ref[...], preferred_element_type=jnp.float32) + bh_ref[...]

        # clamp only the log_std lanes; mask built from a single-row iota and
        # broadcast by the select (cheaper than a full-tile iota per step).
        col = jax.lax.broadcasted_iota(jnp.int32, (1, heads.shape[-1]), 1)
        is_log_std = (col >= A) & (col < 2 * A)
        clamped = jnp.clip(heads, LOG_SIG_MIN, LOG_SIG_MAX)
        out_ref[...] = jnp.where(is_log_std, clamped, heads).astype(out_ref.dtype)

    return kernel


def prepare_params(params, compute_dtype=jnp.bfloat16):
    """Fuse mean/log_std heads, pad feature dims to lane multiples, cast weights.

    Call ONCE outside the per-step path; gaussian_policy_forward consumes the
    result directly, so no concat/pad/cast of weights happens per forward call.
    Zero padding is exact (padded rows/cols contribute 0 to every dot/bias).
    Biases are kept in float32 (they are added to the f32 accumulator).
    """
    S, H = params["w1"].shape
    A = params["wm"].shape[1]
    H_pad = _round_up(H, 128)
    O_pad = _round_up(2 * A, 128)

    def padw(a, rows, cols):
        a = a.astype(jnp.float32)
        a = jnp.pad(a, ((0, rows - a.shape[0]), (0, cols - a.shape[1])))
        return a.astype(compute_dtype)

    def padb(a, cols):
        a = a.astype(jnp.float32)
        return jnp.pad(a, ((0, 0), (0, cols - a.shape[1])))

    wh = jnp.concatenate([params["wm"], params["ws"]], axis=1)   # (H, 2A)
    bh = jnp.concatenate([params["bm"], params["bs"]], axis=1)   # (1, 2A)

    return {
        "w1": padw(params["w1"], S, H_pad),
        "b1": padb(params["b1"], H_pad),
        "w2": padw(params["w2"], H_pad, H_pad),
        "b2": padb(params["b2"], H_pad),
        "wh": padw(wh, H_pad, O_pad),
        "bh": padb(bh, O_pad),
    }


@functools.partial(
    jax.jit, static_argnames=("num_actions", "max_tile_b", "vmem_budget_mb")
)
def gaussian_policy_forward(state, prepared, *, num_actions,
                            max_tile_b=2048, vmem_budget_mb=32):
    """SAC actor MLP forward as one pallas_call. Returns (mean, log_std), each (B, A)."""
    A = num_actions
    B, S = state.shape
    w1, b1 = prepared["w1"], prepared["b1"]
    w2, b2 = prepared["w2"], prepared["b2"]
    wh, bh = prepared["wh"], prepared["bh"]
    H_pad = w1.shape[1]
    O_pad = wh.shape[1]
    cdt = w1.dtype
    in_b = jnp.dtype(cdt).itemsize

    # --- batch tiling: sublane-align only (no full-batch pad; grid uses cdiv) ---
    align = 8 if in_b == 4 else (16 if in_b == 2 else 32)
    B_pad = _round_up(max(B, align), align)

    # VMEM budget -> tile cap.  state/out tiles double-buffered, weights single-
    # buffered (Buffered(1)), f32 intermediates (h1/h2/heads) + their casts.
    budget = vmem_budget_mb * (1 << 20)
    weight_bytes = ((S * H_pad + H_pad * H_pad + H_pad * O_pad) * in_b
                    + 8 * (2 * H_pad + O_pad) * 4)
    per_row = (2 * S * in_b          # state tile x2
               + 4 * O_pad * 4       # out tile x2 + heads + select result (f32)
               + 2 * H_pad * (4 + in_b))  # h1/h2 f32 + compute-dtype casts
    avail = max(budget - weight_bytes - (2 << 20), per_row * align)
    tile_cap = max(align, min(max_tile_b, (avail // per_row) // align * align))

    # >=2 grid steps whenever the batch allows it (keeps both v7x TCs busy),
    # otherwise as large a tile as the budget permits (fewer ~0.35us steps).
    TILE_B = max(align, min(tile_cap, _round_up(pl.cdiv(B_pad, 2), align)))
    TILE_B = min(TILE_B, B_pad)
    grid = (pl.cdiv(B_pad, TILE_B),)

    est = weight_bytes + TILE_B * per_row + (2 << 20)
    vmem_limit = int(min(60 << 20, max(32 << 20, 2 * est)))   # <= v7x 64 MiB physical

    state = state.astype(cdt)
    if B_pad != B:                                   # at most align-1 extra rows
        state = jnp.pad(state, ((0, B_pad - B), (0, 0)))

    wspec = dict(pipeline_mode=pl.Buffered(1))       # grid-invariant: single buffer

    out = pl.pallas_call(
        _make_kernel(A),
        out_shape=jax.ShapeDtypeStruct((B_pad, O_pad), jnp.float32),
        grid=grid,
        in_specs=[
            # state tile: iterates over the batch grid (double-buffered);
            # last dim == full S, so no lane padding / no extra state copy.
            pl.BlockSpec((TILE_B, S), lambda i: (i, 0)),
            # weights / biases: constant index_map -> VMEM-resident, single-buffered.
            pl.BlockSpec((S, H_pad), lambda i: (0, 0), **wspec),
            pl.BlockSpec((1, H_pad), lambda i: (0, 0), **wspec),
            pl.BlockSpec((H_pad, H_pad), lambda i: (0, 0), **wspec),
            pl.BlockSpec((1, H_pad), lambda i: (0, 0), **wspec),
            pl.BlockSpec((H_pad, O_pad), lambda i: (0, 0), **wspec),
            pl.BlockSpec((1, O_pad), lambda i: (0, 0), **wspec),
        ],
        out_specs=pl.BlockSpec((TILE_B, O_pad), lambda i: (i, 0)),
        compiler_params=pltpu.CompilerParams(
            dimension_semantics=("parallel",),
            vmem_limit_bytes=vmem_limit,
        ),
    )(state, w1, b1, w2, b2, wh, bh)

    mean = out[:B, :A]
    log_std = out[:B, A:2 * A]
    return mean, log_std


def xavier_uniform(key, fan_in, fan_out, gain=1.0):
    """Matches torch.nn.init.xavier_uniform_ (gain=1)."""
    limit = gain * jnp.sqrt(6.0 / (fan_in + fan_out))
    # stored as [in, out] so the kernel computes x @ W
    return jax.random.uniform(key, (fan_in, fan_out), jnp.float32, -limit, limit)


def init_params(key, state_dim, num_actions, hidden_dim):
    k1, k2, k3, k4 = jax.random.split(key, 4)
    return {
        # weights: xavier_uniform(gain=1), biases: zeros  (weights_init_)
        "w1": xavier_uniform(k1, state_dim, hidden_dim),
        "b1": jnp.zeros((1, hidden_dim), jnp.float32),
        "w2": xavier_uniform(k2, hidden_dim, hidden_dim),
        "b2": jnp.zeros((1, hidden_dim), jnp.float32),
        "wm": xavier_uniform(k3, hidden_dim, num_actions),
        "bm": jnp.zeros((1, num_actions), jnp.float32),
        "ws": xavier_uniform(k4, hidden_dim, num_actions),
        "bs": jnp.zeros((1, num_actions), jnp.float32),
    }


def reference_forward(state, params):
    """Pure-JAX f32 reference for verification."""
    x = jnp.maximum(state @ params["w1"] + params["b1"], 0.0)
    x = jnp.maximum(x @ params["w2"] + params["b2"], 0.0)
    mean = x @ params["wm"] + params["bm"]
    log_std = jnp.clip(x @ params["ws"] + params["bs"], LOG_SIG_MIN, LOG_SIG_MAX)
    return mean, log_std


if __name__ == "__main__":
    # small shapes consistent with a SAC policy MLP
    batch = 2
    state_dim = 16
    hidden_dim = 32
    num_actions = 8

    key = jax.random.PRNGKey(0)
    k_state, k_params = jax.random.split(key)

    state = jax.random.normal(k_state, (batch, state_dim), jnp.float32)
    params = init_params(k_params, state_dim, num_actions, hidden_dim)
    mean_ref, log_std_ref = reference_forward(state, params)

    # --- f32 path: tight check of the fused-kernel semantics ---
    prep_f32 = prepare_params(params, compute_dtype=jnp.float32)
    mean, log_std = gaussian_policy_forward(state, prep_f32, num_actions=num_actions)
    jax.block_until_ready((mean, log_std))
    assert mean.shape == (batch, num_actions)
    assert log_std.shape == (batch, num_actions)
    assert jnp.allclose(mean, mean_ref, atol=1e-4, rtol=1e-4)
    assert jnp.allclose(log_std, log_std_ref, atol=1e-4, rtol=1e-4)

    # --- bf16 path (default/production): looser tolerance vs the f32 reference ---
    prep_bf16 = prepare_params(params, compute_dtype=jnp.bfloat16)
    mean_b, log_std_b = gaussian_policy_forward(state, prep_bf16, num_actions=num_actions)
    jax.block_until_ready((mean_b, log_std_b))
    assert mean_b.shape == (batch, num_actions)
    assert log_std_b.shape == (batch, num_actions)
    assert jnp.allclose(mean_b, mean_ref, atol=5e-2, rtol=5e-2)
    assert jnp.allclose(log_std_b, log_std_ref, atol=5e-2, rtol=5e-2)

    # TODO(synk): GaussianPolicy.sample() (exp/tanh/log_prob with pltpu PRNG) could
    # also be fused into this kernel; only forward() is implemented here per spec.
    print("KERNEL_OK")
</pallas_src>

<mosaic_0001>
module attributes {stable_mosaic.version = 11 : i64} {
  func.func @kernel(%arg0: i32, %arg1: memref<8x16xf32, #tpu.memory_space<vmem>>, %arg2: memref<16x128xf32, #tpu.memory_space<vmem>>, %arg3: memref<1x128xf32, #tpu.memory_space<vmem>>, %arg4: memref<128x128xf32, #tpu.memory_space<vmem>>, %arg5: memref<1x128xf32, #tpu.memory_space<vmem>>, %arg6: memref<128x128xf32, #tpu.memory_space<vmem>>, %arg7: memref<1x128xf32, #tpu.memory_space<vmem>>, %arg8: memref<8x128xf32, #tpu.memory_space<vmem>>) attributes {dimension_semantics = [#tpu.dimension_semantics<parallel>], iteration_bounds = array<i64: 1>, scalar_prefetch = 0 : i64, scratch_operands = 0 : i64, tpu.core_type = #tpu.core_type<tc>, window_params = [{transform_indices = @transform_0, window_bounds = array<i64: 8, 16>}, {pipeline_mode = #tpu.pipeline_mode<synchronous>, transform_indices = @transform_1, window_bounds = array<i64: 16, 128>}, {pipeline_mode = #tpu.pipeline_mode<synchronous>, transform_indices = @transform_2, window_bounds = array<i64: 1, 128>}, {pipeline_mode = #tpu.pipeline_mode<synchronous>, transform_indices = @transform_3, window_bounds = array<i64: 128, 128>}, {pipeline_mode = #tpu.pipeline_mode<synchronous>, transform_indices = @transform_4, window_bounds = array<i64: 1, 128>}, {pipeline_mode = #tpu.pipeline_mode<synchronous>, transform_indices = @transform_5, window_bounds = array<i64: 128, 128>}, {pipeline_mode = #tpu.pipeline_mode<synchronous>, transform_indices = @transform_6, window_bounds = array<i64: 1, 128>}, {transform_indices = @transform_7, window_bounds = array<i64: 8, 128>}]} {
    %c0 = arith.constant 0 : index
    %c0_0 = arith.constant 0 : index
    %0 = vector.load %arg1[%c0, %c0_0] : memref<8x16xf32, #tpu.memory_space<vmem>>, vector<8x16xf32>
    %c0_1 = arith.constant 0 : index
    %c0_2 = arith.constant 0 : index
    %1 = vector.load %arg2[%c0_1, %c0_2] : memref<16x128xf32, #tpu.memory_space<vmem>>, vector<16x128xf32>
    %cst = arith.constant dense<0.000000e+00> : vector<8x128xf32>
    %2 = tpu.matmul %0, %1, %cst {dimension_numbers = #tpu.dot_dimension_numbers<[1], [0], [0], [1], [0, 0, 1, 1], [], []>} : vector<8x16xf32>, vector<16x128xf32>, vector<8x128xf32> -> vector<8x128xf32>
    %c0_3 = arith.constant 0 : index
    %c0_4 = arith.constant 0 : index
    %3 = vector.load %arg3[%c0_3, %c0_4] : memref<1x128xf32, #tpu.memory_space<vmem>>, vector<1x128xf32>
    %4 = vector.broadcast %3 : vector<1x128xf32> to vector<8x128xf32>
    %5 = arith.addf %2, %4 : vector<8x128xf32>
    %cst_5 = arith.constant 0.000000e+00 : f32
    %6 = vector.broadcast %cst_5 : f32 to vector<8x128xf32>
    %7 = arith.maximumf %5, %6 : vector<8x128xf32>
    %c0_6 = arith.constant 0 : index
    %c0_7 = arith.constant 0 : index
    %8 = vector.load %arg4[%c0_6, %c0_7] : memref<128x128xf32, #tpu.memory_space<vmem>>, vector<128x128xf32>
    %cst_8 = arith.constant dense<0.000000e+00> : vector<8x128xf32>
    %9 = tpu.matmul %7, %8, %cst_8 {dimension_numbers = #tpu.dot_dimension_numbers<[1], [0], [0], [1], [0, 0, 1, 1], [], []>} : vector<8x128xf32>, vector<128x128xf32>, vector<8x128xf32> -> vector<8x128xf32>
    %c0_9 = arith.constant 0 : index
    %c0_10 = arith.constant 0 : index
    %10 = vector.load %arg5[%c0_9, %c0_10] : memref<1x128xf32, #tpu.memory_space<vmem>>, vector<1x128xf32>
    %11 = vector.broadcast %10 : vector<1x128xf32> to vector<8x128xf32>
    %12 = arith.addf %9, %11 : vector<8x128xf32>
    %cst_11 = arith.constant 0.000000e+00 : f32
    %13 = vector.broadcast %cst_11 : f32 to vector<8x128xf32>
    %14 = arith.maximumf %12, %13 : vector<8x128xf32>
    %c0_12 = arith.constant 0 : index
    %c0_13 = arith.constant 0 : index
    %15 = vector.load %arg6[%c0_12, %c0_13] : memref<128x128xf32, #tpu.memory_space<vmem>>, vector<128x128xf32>
    %cst_14 = arith.constant dense<0.000000e+00> : vector<8x128xf32>
    %16 = tpu.matmul %14, %15, %cst_14 {dimension_numbers = #tpu.dot_dimension_numbers<[1], [0], [0], [1], [0, 0, 1, 1], [], []>} : vector<8x128xf32>, vector<128x128xf32>, vector<8x128xf32> -> vector<8x128xf32>
    %c0_15 = arith.constant 0 : index
    %c0_16 = arith.constant 0 : index
    %17 = vector.load %arg7[%c0_15, %c0_16] : memref<1x128xf32, #tpu.memory_space<vmem>>, vector<1x128xf32>
    %18 = vector.broadcast %17 : vector<1x128xf32> to vector<8x128xf32>
    %19 = arith.addf %16, %18 : vector<8x128xf32>
    %20 = tpu.iota {dimensions = array<i32: 1>} : vector<1x128xi32>
    %c8_i32 = arith.constant 8 : i32
    %21 = vector.broadcast %c8_i32 : i32 to vector<1x128xi32>
    %22 = arith.cmpi sge, %20, %21 : vector<1x128xi32>
    %c16_i32 = arith.constant 16 : i32
    %23 = vector.broadcast %c16_i32 : i32 to vector<1x128xi32>
    %24 = arith.cmpi slt, %20, %23 : vector<1x128xi32>
    %25 = arith.andi %22, %24 : vector<1x128xi1>
    %cst_17 = arith.constant -2.000000e+01 : f32
    %cst_18 = arith.constant 2.000000e+00 : f32
    %26 = vector.broadcast %cst_17 : f32 to vector<8x128xf32>
    %27 = arith.maximumf %26, %19 : vector<8x128xf32>
    %28 = vector.broadcast %cst_18 : f32 to vector<8x128xf32>
    %29 = arith.minimumf %28, %27 : vector<8x128xf32>
    %30 = vector.shape_cast %25 : vector<1x128xi1> to vector<1x128xi1>
    %31 = vector.broadcast %30 : vector<1x128xi1> to vector<8x128xi1>
    %32 = arith.select %31, %29, %19 : vector<8x128xi1>, vector<8x128xf32>
    %c0_19 = arith.constant 0 : index
    %c0_20 = arith.constant 0 : index
    %33 = vector.load %arg8[%c0_19, %c0_20] : memref<8x128xf32, #tpu.memory_space<vmem>>, vector<8x128xf32>
    tpu.vector_store %arg8[%c0_19, %c0_20], %32 {strides = array<i32>} : memref<8x128xf32, #tpu.memory_space<vmem>>, vector<8x128xf32>,
    return
  }
  func.func @transform_0(%arg0: i32) -> (i32, i32) {
    %c0_i32 = arith.constant 0 : i32
    %c0_i32_0 = arith.constant 0 : i32
    return %arg0, %c0_i32 : i32, i32
  }
  func.func @transform_1(%arg0: i32) -> (i32, i32) {
    %c0_i32 = arith.constant 0 : i32
    %c0_i32_0 = arith.constant 0 : i32
    %c0_i32_1 = arith.constant 0 : i32
    return %c0_i32, %c0_i32_0 : i32, i32
  }
  func.func @transform_2(%arg0: i32) -> (i32, i32) {
    %c0_i32 = arith.constant 0 : i32
    %c0_i32_0 = arith.constant 0 : i32
    %c0_i32_1 = arith.constant 0 : i32
    return %c0_i32, %c0_i32_0 : i32, i32
  }
  func.func @transform_3(%arg0: i32) -> (i32, i32) {
    %c0_i32 = arith.constant 0 : i32
    %c0_i32_0 = arith.constant 0 : i32
    %c0_i32_1 = arith.constant 0 : i32
    return %c0_i32, %c0_i32_0 : i32, i32
  }
  func.func @transform_4(%arg0: i32) -> (i32, i32) {
    %c0_i32 = arith.constant 0 : i32
    %c0_i32_0 = arith.constant 0 : i32
    %c0_i32_1 = arith.constant 0 : i32
    return %c0_i32, %c0_i32_0 : i32, i32
  }
  func.func @transform_5(%arg0: i32) -> (i32, i32) {
    %c0_i32 = arith.constant 0 : i32
    %c0_i32_0 = arith.constant 0 : i32
    %c0_i32_1 = arith.constant 0 : i32
    return %c0_i32, %c0_i32_0 : i32, i32
  }
  func.func @transform_6(%arg0: i32) -> (i32, i32) {
    %c0_i32 = arith.constant 0 : i32
    %c0_i32_0 = arith.constant 0 : i32
    %c0_i32_1 = arith.constant 0 : i32
    return %c0_i32, %c0_i32_0 : i32, i32
  }
  func.func @transform_7(%arg0: i32) -> (i32, i32) {
    %c0_i32 = arith.constant 0 : i32
    %c0_i32_0 = arith.constant 0 : i32
    return %arg0, %c0_i32 : i32, i32
  }
}

</mosaic_0001>

<llo_original>
// kernel: gaussian_policy_forward.1
$region0: #{gaussian_policy_forward.1}
  #allocation0 [shape = 'u32[]', space=smem, size = 0x4, offset = 0x4, fixed_abs, tag = 'smem constant byte address 0x4 - core index']
  #allocation1 [shape = 'u32[144,128]{1,0:T(1,128)}', space=vmem, size = 0x12000, scoped, tag = 'internal scratch']
  %s0 = inlined_call_operand.vmem [shape: f32[8,16], index: 0, kind: input, shape index: {}]
  %s1 = inlined_call_operand.vmem [shape: f32[16,128], index: 1, kind: input, shape index: {}]
  %s2 = inlined_call_operand.vmem [shape: f32[1,128], index: 2, kind: input, shape index: {}]
  %s3 = inlined_call_operand.hbm [shape: f32[128,128], index: 3, kind: input, shape index: {}]
  %s4 = inlined_call_operand.vmem [shape: f32[1,128], index: 4, kind: input, shape index: {}]
  %s5 = inlined_call_operand.hbm [shape: f32[128,128], index: 5, kind: input, shape index: {}]
  %s6 = inlined_call_operand.vmem [shape: f32[1,128], index: 6, kind: input, shape index: {}]
  %s7 = inlined_call_operand.vmem [shape: f32[8,128], index: 7, kind: output, shape index: {}]
  %s8 = sld [smem:[#allocation0]]
  $region46: #{gaussian_policy_forward.1} parent=0
    _
  %s10 = ssub.s32 1, %s8
  %s11 = scalar_select 0, %s10, %s8
  $region1: #{gaussian_policy_forward.1} parent=0
    #allocation2 [shape = 'u8[65536]{0}', space=vmem, size = 0x10000, scoped, tag = 'input window, operand 3, single buffered']
    #allocation3 [shape = 's32[1]{0}', space=sflag, size = 0x4, scoped, tag = 'scoped memory for gaussian_policy_forward.1']
    #allocation4 [shape = 'u8[65536]{0}', space=vmem, size = 0x10000, scoped, tag = 'input window, operand 5, single buffered']
    #allocation5 [shape = 's32[1]{0}', space=sflag, size = 0x4, scoped, tag = 'scoped memory for gaussian_policy_forward.1']
    %12 = vsyncpa [#allocation3], 0
    %13 = vsyncpa [#allocation5], 0
    // Predicated region
    $region2: #{gaussian_policy_forward.1} parent=1 // pred_check
      _
    $region3: #{gaussian_policy_forward.1} parent=1 // pred_check_branch
      %15 = sbr.rel (0) target = $region5
    $region4: #{gaussian_policy_forward.1} parent=1 // pred_region
      _
    $region5: #{gaussian_policy_forward.1} parent=1 // pred_fallthru
      _
    // Predicated region
    $region6: #{gaussian_policy_forward.1} parent=1 // pred_check
      _
    $region7: #{gaussian_policy_forward.1} parent=1 // pred_check_branch
      %17 = sbr.rel (0) target = $region9
    $region8: #{gaussian_policy_forward.1} parent=1 // pred_region
      _
    $region9: #{gaussian_policy_forward.1} parent=1 // pred_fallthru
      _
    // Predicated region
    $region10: #{gaussian_policy_forward.1} parent=1 // pred_check
      _
    $region11: #{gaussian_policy_forward.1} parent=1 // pred_check_branch
      %19 = sbr.rel (0) target = $region13
    $region12: #{gaussian_policy_forward.1} parent=1 // pred_region
      _
    $region13: #{gaussian_policy_forward.1} parent=1 // pred_fallthru
      _
    // Predicated region
    $region14: #{gaussian_policy_forward.1} parent=1 // pred_check
      _
    $region15: #{gaussian_policy_forward.1} parent=1 // pred_check_branch
      %21 = sbr.rel (0) target = $region17
    $region16: #{gaussian_policy_forward.1} parent=1 // pred_region
      %s23 = ssub.s32 2048, 2048
      %24 = vsyncadd [#allocation3], %s23
      %s25 = sshll.u32 [#allocation2], 4
      %s26 = int_to_ptr.vmem [resolvable:$true] %s25
      %31 = dma.hbm_to_vmem [thread:$0]  %s3, 2048, %s26, [#allocation3], 128, 128, 8
    $region17: #{gaussian_policy_forward.1} parent=1 // pred_fallthru
      _
    // Predicated region
    $region18: #{gaussian_policy_forward.1} parent=1 // pred_check
      _
    $region19: #{gaussian_policy_forward.1} parent=1 // pred_check_branch
      %33 = sbr.rel (0) target = $region21
    $region20: #{gaussian_policy_forward.1} parent=1 // pred_region
      _
    $region21: #{gaussian_policy_forward.1} parent=1 // pred_fallthru
      _
    // Predicated region
    $region22: #{gaussian_policy_forward.1} parent=1 // pred_check
      _
    $region23: #{gaussian_policy_forward.1} parent=1 // pred_check_branch
      %35 = sbr.rel (0) target = $region25
    $region24: #{gaussian_policy_forward.1} parent=1 // pred_region
      %s37 = ssub.s32 2048, 2048
      %38 = vsyncadd [#allocation5], %s37
      %s39 = sshll.u32 [#allocation4], 4
      %s40 = int_to_ptr.vmem [resolvable:$true] %s39
      %45 = dma.hbm_to_vmem [thread:$0]  %s5, 2048, %s40, [#allocation5], 128, 128, 8
    $region25: #{gaussian_policy_forward.1} parent=1 // pred_fallthru
      _
    // Predicated region
    $region26: #{gaussian_policy_forward.1} parent=1 // pred_check
      _
    $region27: #{gaussian_policy_forward.1} parent=1 // pred_check_branch
      %47 = sbr.rel (0) target = $region29
    $region28: #{gaussian_policy_forward.1} parent=1 // pred_region
      _
    $region29: #{gaussian_policy_forward.1} parent=1 // pred_fallthru
      _
    // Predicated region
    $region30: #{gaussian_policy_forward.1} parent=1 // pred_check
      _
    $region31: #{gaussian_policy_forward.1} parent=1 // pred_check_branch
      %49 = sbr.rel (0) target = $region33
    $region32: #{gaussian_policy_forward.1} parent=1 // pred_region
      %50 = dma.done [#allocation3], 2048
    $region33: #{gaussian_policy_forward.1} parent=1 // pred_fallthru
      _
    // Predicated region
    $region34: #{gaussian_policy_forward.1} parent=1 // pred_check
      _
    $region35: #{gaussian_policy_forward.1} parent=1 // pred_check_branch
      %52 = sbr.rel (0) target = $region37
    $region36: #{gaussian_policy_forward.1} parent=1 // pred_region
      %53 = dma.done [#allocation5], 2048
    $region37: #{gaussian_policy_forward.1} parent=1 // pred_fallthru
      _
    %v54 = vld [vmem:[%s0] sm:$0xff]
    %v55 = vld [vmem:[%s1] sm:$0xff]
    %v56 = vld [vmem:[%s1 + $0x8] sm:$0xff]
    %v57 = vld [vmem:[%s2] sm:$0x1]
    %v59 = vlaneseq
    %v60 = vshrl.u32 %v59, 7
    %v61 = vsub.s32 0, %v60
    %v62 = vrot.slane %v57, %v61
    %vm64 = vcmask 130048
    %v66 = vsel %vm64, %v54, 0
    %68 = vmatprep.subr.mxu0 0.0
    %69 = vmatpush1.msra.mxu0 %v55
    %70 = vmatprep.subr.mxu0 0.0
    %71 = vmatpush1.msra.mxu0 %v56
    %72 = vmatprep.subr.mxu0 0.0
    %73 = vmatpush1.msra.mxu0 0.0
    %74 = vmatprep.subr.mxu0 0.0
    %75 = vmatpush1.msra.mxu0 0.0
    %76 = vmatprep.subr.mxu0 0.0
    %77 = vmatpush1.msra.mxu0 0.0
    %78 = vmatprep.subr.mxu0 0.0
    %79 = vmatpush1.msra.mxu0 0.0
    %80 = vmatprep.subr.mxu0 0.0
    %81 = vmatpush1.msra.mxu0 0.0
    %82 = vmatprep.subr.mxu0 0.0
    %83 = vmatpush1.msra.mxu0 0.0
    %84 = vmatprep.subr.mxu0 0.0
    %85 = vmatpush1.msra.mxu0 0.0
    %86 = vmatprep.subr.mxu0 0.0
    %87 = vmatpush1.msra.mxu0 0.0
    %88 = vmatprep.subr.mxu0 0.0
    %89 = vmatpush1.msra.mxu0 0.0
    %90 = vmatprep.subr.mxu0 0.0
    %91 = vmatpush1.msra.mxu0 0.0
    %92 = vmatprep.subr.mxu0 0.0
    %93 = vmatpush1.msra.mxu0 0.0
    %94 = vmatprep.subr.mxu0 0.0
    %95 = vmatpush1.msra.mxu0 0.0
    %96 = vmatprep.subr.mxu0 0.0
    %97 = vmatpush1.msra.mxu0 0.0
    %98 = vmatprep.subr.mxu0 0.0
    %99 = vmatpush1.msra.mxu0 0.0
    %100 = vmatprep.subr.mxu0 0.0
    %101 = vmatpush1.msra.mxu0 0.0
    %102 = vmatprep.subr.mxu0 0.0
    %103 = vmatpush1.msra.mxu0 0.0
    %104 = vmatprep.subr.mxu0 0.0
    %105 = vmatpush1.msra.mxu0 0.0
    %106 = vmatprep.subr.mxu0 0.0
    %107 = vmatpush1.msra.mxu0 0.0
    %108 = vmatprep.subr.mxu0 0.0
    %109 = vmatpush1.msra.mxu0 0.0
    %110 = vmatprep.subr.mxu0 0.0
    %111 = vmatpush1.msra.mxu0 0.0
    %112 = vmatprep.subr.mxu0 0.0
    %113 = vmatpush1.msra.mxu0 0.0
    %114 = vmatprep.subr.mxu0 0.0
    %115 = vmatpush1.msra.mxu0 0.0
    %116 = vmatprep.subr.mxu0 0.0
    %117 = vmatpush1.msra.mxu0 0.0
    %118 = vmatprep.subr.mxu0 0.0
    %119 = vmatpush1.msra.mxu0 0.0
    %120 = vmatprep.subr.mxu0 0.0
    %121 = vmatpush1.msra.mxu0 0.0
    %122 = vmatprep.subr.mxu0 0.0
    %123 = vmatpush1.msra.mxu0 0.0
    %124 = vmatprep.subr.mxu0 0.0
    %125 = vmatpush1.msra.mxu0 0.0
    %126 = vmatprep.subr.mxu0 0.0
    %127 = vmatpush1.msra.mxu0 0.0
    %128 = vmatprep.subr.mxu0 0.0
    %129 = vmatpush1.msra.mxu0 0.0
    %130 = vmatprep.subr.mxu0 0.0
    %131 = vmatpush1.msra.mxu0 0.0
    %132 = vmatprep.mubr.f32.mxu0 0.0
    %133 = vmatmul.mubr.f32.gmra.mrb[0].mxu0 %v66
    %v134 = vpop.f32.mrb[0].mxu0
    %v135 = vadd.f32 %v62, %v134
    %v136 = vpop.f32.mrb[0].mxu0
    %137 = vdwg.mxu0
    %v138 = vmax.f32 %v135, 0.0
    %v139 = vld [vmem:[#allocation2] sm:$0xff]
    %v140 = vld [vmem:[#allocation2 + $0x8] sm:$0xff]
    %v141 = vld [vmem:[#allocation2 + $0x10] sm:$0xff]
    %v142 = vld [vmem:[#allocation2 + $0x18] sm:$0xff]
    %v143 = vld [vmem:[#allocation2 + $0x20] sm:$0xff]
    %v144 = vld [vmem:[#allocation2 + $0x28] sm:$0xff]
    %v145 = vld [vmem:[#allocation2 + $0x30] sm:$0xff]
    %v146 = vld [vmem:[#allocation2 + $0x38] sm:$0xff]
    %v147 = vld [vmem:[#allocation2 + $0x40] sm:$0xff]
    %v148 = vld [vmem:[#allocation2 + $0x48] sm:$0xff]
    %v149 = vld [vmem:[#allocation2 + $0x50] sm:$0xff]
    %v150 = vld [vmem:[#allocation2 + $0x58] sm:$0xff]
    %v151 = vld [vmem:[#allocation2 + $0x60] sm:$0xff]
    %v152 = vld [vmem:[#allocation2 + $0x68] sm:$0xff]
    %v153 = vld [vmem:[#allocation2 + $0x70] sm:$0xff]
    %v154 = vld [vmem:[#allocation2 + $0x78] sm:$0xff]
    %v155 = vld [vmem:[%s4] sm:$0x1]
    %v157 = vlaneseq
    %v158 = vshrl.u32 %v157, 7
    %v159 = vsub.s32 0, %v158
    %v160 = vrot.slane %v155, %v159
    %162 = vmatprep.subr.mxu0 0.0
    %163 = vmatpush1.msra.mxu0 %v139
    %164 = vmatprep.subr.mxu0 0.0
    %165 = vmatpush1.msra.mxu0 %v140
    %166 = vmatprep.subr.mxu0 0.0
    %167 = vmatpush1.msra.mxu0 %v141
    %168 = vmatprep.subr.mxu0 0.0
    %169 = vmatpush1.msra.mxu0 %v142
    %170 = vmatprep.subr.mxu0 0.0
    %171 = vmatpush1.msra.mxu0 %v143
    %172 = vmatprep.subr.mxu0 0.0
    %173 = vmatpush1.msra.mxu0 %v144
    %174 = vmatprep.subr.mxu0 0.0
    %175 = vmatpush1.msra.mxu0 %v145
    %176 = vmatprep.subr.mxu0 0.0
    %177 = vmatpush1.msra.mxu0 %v146
    %178 = vmatprep.subr.mxu0 0.0
    %179 = vmatpush1.msra.mxu0 %v147
    %180 = vmatprep.subr.mxu0 0.0
    %181 = vmatpush1.msra.mxu0 %v148
    %182 = vmatprep.subr.mxu0 0.0
    %183 = vmatpush1.msra.mxu0 %v149
    %184 = vmatprep.subr.mxu0 0.0
    %185 = vmatpush1.msra.mxu0 %v150
    %186 = vmatprep.subr.mxu0 0.0
    %187 = vmatpush1.msra.mxu0 %v151
    %188 = vmatprep.subr.mxu0 0.0
    %189 = vmatpush1.msra.mxu0 %v152
    %190 = vmatprep.subr.mxu0 0.0
    %191 = vmatpush1.msra.mxu0 %v153
    %192 = vmatprep.subr.mxu0 0.0
    %193 = vmatpush1.msra.mxu0 %v154
    %194 = vmatprep.subr.mxu0 0.0
    %195 = vmatpush1.msra.mxu0 0.0
    %196 = vmatprep.subr.mxu0 0.0
    %197 = vmatpush1.msra.mxu0 0.0
    %198 = vmatprep.subr.mxu0 0.0
    %199 = vmatpush1.msra.mxu0 0.0
    %200 = vmatprep.subr.mxu0 0.0
    %201 = vmatpush1.msra.mxu0 0.0
    %202 = vmatprep.subr.mxu0 0.0
    %203 = vmatpush1.msra.mxu0 0.0
    %204 = vmatprep.subr.mxu0 0.0
    %205 = vmatpush1.msra.mxu0 0.0
    %206 = vmatprep.subr.mxu0 0.0
    %207 = vmatpush1.msra.mxu0 0.0
    %208 = vmatprep.subr.mxu0 0.0
    %209 = vmatpush1.msra.mxu0 0.0
    %210 = vmatprep.subr.mxu0 0.0
    %211 = vmatpush1.msra.mxu0 0.0
    %212 = vmatprep.subr.mxu0 0.0
    %213 = vmatpush1.msra.mxu0 0.0
    %214 = vmatprep.subr.mxu0 0.0
    %215 = vmatpush1.msra.mxu0 0.0
    %216 = vmatprep.subr.mxu0 0.0
    %217 = vmatpush1.msra.mxu0 0.0
    %218 = vmatprep.subr.mxu0 0.0
    %219 = vmatpush1.msra.mxu0 0.0
    %220 = vmatprep.subr.mxu0 0.0
    %221 = vmatpush1.msra.mxu0 0.0
    %222 = vmatprep.subr.mxu0 0.0
    %223 = vmatpush1.msra.mxu0 0.0
    %224 = vmatprep.subr.mxu0 0.0
    %225 = vmatpush1.msra.mxu0 0.0
    %226 = vmatprep.mubr.f32.mxu0 0.0
    %227 = vmatmul.mubr.f32.gmra.mrb[0].mxu0 %v138
    %v228 = vpop.f32.mrb[0].mxu0
    %v229 = vadd.f32 %v160, %v228
    %v230 = vpop.f32.mrb[0].mxu0
    %231 = vdwg.mxu0
    %v232 = vmax.f32 %v229, 0.0
    %v233 = vld [vmem:[#allocation4] sm:$0xff]
    %v234 = vld [vmem:[#allocation4 + $0x8] sm:$0xff]
    %v235 = vld [vmem:[#allocation4 + $0x10] sm:$0xff]
    %v236 = vld [vmem:[#allocation4 + $0x18] sm:$0xff]
    %v237 = vld [vmem:[#allocation4 + $0x20] sm:$0xff]
    %v238 = vld [vmem:[#allocation4 + $0x28] sm:$0xff]
    %v239 = vld [vmem:[#allocation4 + $0x30] sm:$0xff]
    %v240 = vld [vmem:[#allocation4 + $0x38] sm:$0xff]
    %v241 = vld [vmem:[#allocation4 + $0x40] sm:$0xff]
    %v242 = vld [vmem:[#allocation4 + $0x48] sm:$0xff]
    %v243 = vld [vmem:[#allocation4 + $0x50] sm:$0xff]
    %v244 = vld [vmem:[#allocation4 + $0x58] sm:$0xff]
    %v245 = vld [vmem:[#allocation4 + $0x60] sm:$0xff]
    %v246 = vld [vmem:[#allocation4 + $0x68] sm:$0xff]
    %v247 = vld [vmem:[#allocation4 + $0x70] sm:$0xff]
    %v248 = vld [vmem:[#allocation4 + $0x78] sm:$0xff]
    %v249 = vld [vmem:[%s6] sm:$0x1]
    %v251 = vlaneseq
    %v252 = vshrl.u32 %v251, 7
    %v253 = vsub.s32 0, %v252
    %v254 = vrot.slane %v249, %v253
    %256 = vmatprep.subr.mxu0 0.0
    %257 = vmatpush1.msra.mxu0 %v233
    %258 = vmatprep.subr.mxu0 0.0
    %259 = vmatpush1.msra.mxu0 %v234
    %260 = vmatprep.subr.mxu0 0.0
    %261 = vmatpush1.msra.mxu0 %v235
    %262 = vmatprep.subr.mxu0 0.0
    %263 = vmatpush1.msra.mxu0 %v236
    %264 = vmatprep.subr.mxu0 0.0
    %265 = vmatpush1.msra.mxu0 %v237
    %266 = vmatprep.subr.mxu0 0.0
    %267 = vmatpush1.msra.mxu0 %v238
    %268 = vmatprep.subr.mxu0 0.0
    %269 = vmatpush1.msra.mxu0 %v239
    %270 = vmatprep.subr.mxu0 0.0
    %271 = vmatpush1.msra.mxu0 %v240
    %272 = vmatprep.subr.mxu0 0.0
    %273 = vmatpush1.msra.mxu0 %v241
    %274 = vmatprep.subr.mxu0 0.0
    %275 = vmatpush1.msra.mxu0 %v242
    %276 = vmatprep.subr.mxu0 0.0
    %277 = vmatpush1.msra.mxu0 %v243
    %278 = vmatprep.subr.mxu0 0.0
    %279 = vmatpush1.msra.mxu0 %v244
    %280 = vmatprep.subr.mxu0 0.0
    %281 = vmatpush1.msra.mxu0 %v245
    %282 = vmatprep.subr.mxu0 0.0
    %283 = vmatpush1.msra.mxu0 %v246
    %284 = vmatprep.subr.mxu0 0.0
    %285 = vmatpush1.msra.mxu0 %v247
    %286 = vmatprep.subr.mxu0 0.0
    %287 = vmatpush1.msra.mxu0 %v248
    %288 = vmatprep.subr.mxu0 0.0
    %289 = vmatpush1.msra.mxu0 0.0
    %290 = vmatprep.subr.mxu0 0.0
    %291 = vmatpush1.msra.mxu0 0.0
    %292 = vmatprep.subr.mxu0 0.0
    %293 = vmatpush1.msra.mxu0 0.0
    %294 = vmatprep.subr.mxu0 0.0
    %295 = vmatpush1.msra.mxu0 0.0
    %296 = vmatprep.subr.mxu0 0.0
    %297 = vmatpush1.msra.mxu0 0.0
    %298 = vmatprep.subr.mxu0 0.0
    %299 = vmatpush1.msra.mxu0 0.0
    %300 = vmatprep.subr.mxu0 0.0
    %301 = vmatpush1.msra.mxu0 0.0
    %302 = vmatprep.subr.mxu0 0.0
    %303 = vmatpush1.msra.mxu0 0.0
    %304 = vmatprep.subr.mxu0 0.0
    %305 = vmatpush1.msra.mxu0 0.0
    %306 = vmatprep.subr.mxu0 0.0
    %307 = vmatpush1.msra.mxu0 0.0
    %308 = vmatprep.subr.mxu0 0.0
    %309 = vmatpush1.msra.mxu0 0.0
    %310 = vmatprep.subr.mxu0 0.0
    %311 = vmatpush1.msra.mxu0 0.0
    %312 = vmatprep.subr.mxu0 0.0
    %313 = vmatpush1.msra.mxu0 0.0
    %314 = vmatprep.subr.mxu0 0.0
    %315 = vmatpush1.msra.mxu0 0.0
    %316 = vmatprep.subr.mxu0 0.0
    %317 = vmatpush1.msra.mxu0 0.0
    %318 = vmatprep.subr.mxu0 0.0
    %319 = vmatpush1.msra.mxu0 0.0
    %320 = vmatprep.mubr.f32.mxu0 0.0
    %321 = vmatmul.mubr.f32.gmra.mrb[0].mxu0 %v232
    %v322 = vpop.f32.mrb[0].mxu0
    %v323 = vadd.f32 %v254, %v322
    %v324 = vpop.f32.mrb[0].mxu0
    %325 = vdwg.mxu0
    %v326 = vlaneseq
    %v327 = vand.u32 %v326, 127
    %vm328 = vcmp.ge.s32.totalorder %v327, 8
    %vm329 = vcmp.lt.s32.totalorder %v327, 16
    %vm330 = vmand %vm328, %vm329
    %v331 = vmax.f32 %v323, -20.0
    %v332 = vmin.f32 %v331, 2.0
    %v333 = vsel %vm330, 1, 0
    %vm334 = vcmp.eq.s32.totalorder %v333, 1
    %v335 = vsel %vm334, %v332, %v323
    %336 = vst [vmem:[%s7] sm:$0xff] %v335
    // Predicated region
    $region38: #{gaussian_policy_forward.1} parent=1 // pred_check
      _
    $region39: #{gaussian_policy_forward.1} parent=1 // pred_check_branch
      %338 = sbr.rel (0) target = $region41
    $region40: #{gaussian_policy_forward.1} parent=1 // pred_region
      _
    $region41: #{gaussian_policy_forward.1} parent=1 // pred_fallthru
      _
    // Predicated region
    $region42: #{gaussian_policy_forward.1} parent=1 // pred_check
      _
    $region43: #{gaussian_policy_forward.1} parent=1 // pred_check_branch
      %340 = sbr.rel (0) target = $region45
    $region44: #{gaussian_policy_forward.1} parent=1 // pred_region
      _
    $region45: #{gaussian_policy_forward.1} parent=1 // pred_fallthru
      _
    %341 = vsyncpa [#allocation3], 1
    %342 = vsyncpa [#allocation5], 1

</llo_original>
